<compile_context>
chip_gen: v7x
topology: tpu7x:2x2x1
jax: 0.10.0
libtpu: 0.0.40
codegen_flags: <defaults>
</compile_context>

<pallas_src>
import jax
import jax.numpy as jnp
import numpy as np
from jax import lax
from jax.experimental import pallas as pl
from jax.experimental.pallas import tpu as pltpu

_INV_SQRT2 = 0.7071067811865475


def _make_kernel(H, W):
    HW = H * W

    def kernel(x_ref, w_ref, bias_ref, scale_ref, shift_ref,
               row_ref, col_ref, out_ref):
        # x_ref/out_ref: (1, cb, HW)   input tile (also the residual) / output
        # w_ref:         (cb, 9)       depthwise 3x3 weights, row-major taps
        # bias/scale/shift: (cb, 1)    per-channel vectors (BN folded)
        # row_ref/col_ref: (1, HW)     int32 spatial ids for boundary masks
        x = x_ref[0].astype(jnp.float32)          # (cb, HW)
        w = w_ref[...].astype(jnp.float32)        # (cb, 9)
        row = row_ref[...]                        # (1, HW)
        col = col_ref[...]                        # (1, HW)

        # Validity masks for each shift direction (zero padding of the conv).
        edge = {
            -1: (row >= 1, col >= 1),
            1: (row <= H - 2, col <= W - 2),
        }

        # Center tap first (no roll, no mask).
        acc = w[:, 4:5] * x

        # Remaining 8 taps: lane-axis rolls of the flattened plane + masks.
        for a in (-1, 0, 1):
            for b_ in (-1, 0, 1):
                if a == 0 and b_ == 0:
                    continue
                s = a * W + b_                    # flattened shift of the tap
                k = (a + 1) * 3 + (b_ + 1)        # tap index in the 3x3 kernel
                tap = pltpu.roll(x, shift=(-s) % HW, axis=1)
                m = None
                if a != 0:
                    m = edge[a][0]
                if b_ != 0:
                    m = edge[b_][1] if m is None else (m & edge[b_][1])
                tap = jnp.where(m, tap, 0.0)
                acc = acc + w[:, k:k + 1] * tap

        acc = acc + bias_ref[...].astype(jnp.float32)

        # Exact GELU (matches PyTorch nn.GELU default).
        g = 0.5 * acc * (1.0 + lax.erf(acc * _INV_SQRT2))

        # Inference BatchNorm folded to scale/shift, then the residual add.
        y = (scale_ref[...].astype(jnp.float32) * g
             + shift_ref[...].astype(jnp.float32) + x)
        out_ref[0] = y.astype(out_ref.dtype)

    return kernel


def _pick_channel_block(C, HW, itemsize):
    """Largest channel block whose per-step VMEM footprint fits the budget.

    cb must equal C or be a multiple of 8 that divides C (the (8,128) rule on
    the second-to-last block dim).  Footprint counts double-buffered I/O plus
    the live f32 temporaries (x cast, acc, tap, GELU intermediate)."""
    def footprint(cb):
        io = 2 * 2 * cb * HW * itemsize   # in + out blocks, double-buffered
        temps = 4 * cb * HW * 4           # f32 temporaries inside the kernel
        return io + temps

    budget = 8 << 20                      # safe on v5e/v6e/v7x scoped limits
    candidates = sorted(
        {d for d in range(8, C + 1, 8) if C % d == 0} | {C}, reverse=True)
    for cb in candidates:
        if footprint(cb) <= budget:
            return cb
    return candidates[-1]                 # smallest legal block


def residual_cmunext(x, w, b, gamma, beta, running_mean, running_var, eps=1e-5):
    """Residual(fn)(x) = fn(x) + x with fn = DWConv3x3 -> GELU -> BN (eval).

    x: (B, C, H, W) NCHW, w: (C, 1, 3, 3), b/gamma/beta/mean/var: (C,).
    """
    B, C, H, W = x.shape
    HW = H * W

    # Fold BatchNorm (inference) into a per-channel affine: scale * z + shift.
    scale = gamma / jnp.sqrt(running_var + eps)
    shift = beta - running_mean * scale

    # Free reshapes only (contiguous trailing-dim merges); no transposes.
    x2 = x.reshape(B, C, HW)
    w2 = w.reshape(C, 9)
    bias2 = b.reshape(C, 1)
    scale2 = scale.reshape(C, 1)
    shift2 = shift.reshape(C, 1)

    # Tiny spatial id vectors for the in-kernel boundary masks.
    row_ids = jnp.repeat(jnp.arange(H, dtype=jnp.int32), W).reshape(1, HW)
    col_ids = jnp.tile(jnp.arange(W, dtype=jnp.int32), H).reshape(1, HW)

    cb = _pick_channel_block(C, HW, x.dtype.itemsize)
    n_cb = C // cb

    kernel = _make_kernel(H, W)

    out2 = pl.pallas_call(
        kernel,
        out_shape=jax.ShapeDtypeStruct((B, C, HW), x.dtype),
        grid=(B, n_cb),
        in_specs=[
            pl.BlockSpec((1, cb, HW), lambda bi, ci: (bi, ci, 0)),
            pl.BlockSpec((cb, 9), lambda bi, ci: (ci, 0)),
            pl.BlockSpec((cb, 1), lambda bi, ci: (ci, 0)),
            pl.BlockSpec((cb, 1), lambda bi, ci: (ci, 0)),
            pl.BlockSpec((cb, 1), lambda bi, ci: (ci, 0)),
            pl.BlockSpec((1, HW), lambda bi, ci: (0, 0)),
            pl.BlockSpec((1, HW), lambda bi, ci: (0, 0)),
        ],
        out_specs=pl.BlockSpec((1, cb, HW), lambda bi, ci: (bi, ci, 0)),
        compiler_params=pltpu.CompilerParams(
            dimension_semantics=("parallel", "parallel"),
            vmem_limit_bytes=32 * 1024 * 1024),
    )(x2, w2, bias2, scale2, shift2, row_ids, col_ids)

    return out2.reshape(B, C, H, W)


def ref_forward(x, w, b, gamma, beta, running_mean, running_var, eps=1e-5):
    """Pure-JAX reference (NCHW, mirrors the PyTorch module exactly)."""
    C = x.shape[1]
    conv = jax.lax.conv_general_dilated(
        x, w, window_strides=(1, 1), padding=((1, 1), (1, 1)),
        dimension_numbers=("NCHW", "OIHW", "NCHW"),
        feature_group_count=C)
    conv = conv + b[None, :, None, None]
    g = 0.5 * conv * (1.0 + jax.lax.erf(conv * _INV_SQRT2))
    bn = (gamma[None, :, None, None]
          * (g - running_mean[None, :, None, None])
          / jnp.sqrt(running_var[None, :, None, None] + eps)
          + beta[None, :, None, None])
    return bn + x


if __name__ == "__main__":
    key = jax.random.PRNGKey(0)
    kx, kw, kb, kg, kbe, km, kv = jax.random.split(key, 7)

    B, C, H, W = 2, 4, 16, 16
    x = jax.random.normal(kx, (B, C, H, W), dtype=jnp.float32)

    # Deterministic synthetic parameters (depthwise conv + BN, eval mode).
    w = 0.1 * jax.random.normal(kw, (C, 1, 3, 3), dtype=jnp.float32)
    b = 0.1 * jax.random.normal(kb, (C,), dtype=jnp.float32)
    gamma = 1.0 + 0.1 * jax.random.normal(kg, (C,), dtype=jnp.float32)
    beta = 0.1 * jax.random.normal(kbe, (C,), dtype=jnp.float32)
    running_mean = 0.1 * jax.random.normal(km, (C,), dtype=jnp.float32)
    running_var = 0.5 + 0.1 * jnp.abs(jax.random.normal(kv, (C,), dtype=jnp.float32))

    out = residual_cmunext(x, w, b, gamma, beta, running_mean, running_var)
    out = jax.block_until_ready(out)

    expected = ref_forward(x, w, b, gamma, beta, running_mean, running_var)
    np.testing.assert_allclose(np.asarray(out), np.asarray(expected),
                               rtol=1e-5, atol=1e-5)

    print("KERNEL_OK")
</pallas_src>

<mosaic_0001>
module attributes {stable_mosaic.version = 11 : i64} {
  func.func @kernel(%arg0: i32, %arg1: i32, %arg2: memref<1x4x256xf32, #tpu.memory_space<vmem>>, %arg3: memref<4x9xf32, #tpu.memory_space<vmem>>, %arg4: memref<4x1xf32, #tpu.memory_space<vmem>>, %arg5: memref<4x1xf32, #tpu.memory_space<vmem>>, %arg6: memref<4x1xf32, #tpu.memory_space<vmem>>, %arg7: memref<1x256xi32, #tpu.memory_space<vmem>>, %arg8: memref<1x256xi32, #tpu.memory_space<vmem>>, %arg9: memref<1x4x256xf32, #tpu.memory_space<vmem>>) attributes {dimension_semantics = [#tpu.dimension_semantics<parallel>, #tpu.dimension_semantics<parallel>], iteration_bounds = array<i64: 2, 1>, scalar_prefetch = 0 : i64, scratch_operands = 0 : i64, tpu.core_type = #tpu.core_type<tc>, window_params = [{transform_indices = @transform_0, window_bounds = array<i64: 1, 4, 256>}, {transform_indices = @transform_1, window_bounds = array<i64: 4, 9>}, {transform_indices = @transform_2, window_bounds = array<i64: 4, 1>}, {transform_indices = @transform_3, window_bounds = array<i64: 4, 1>}, {transform_indices = @transform_4, window_bounds = array<i64: 4, 1>}, {pipeline_mode = #tpu.pipeline_mode<synchronous>, transform_indices = @transform_5, window_bounds = array<i64: 1, 256>}, {pipeline_mode = #tpu.pipeline_mode<synchronous>, transform_indices = @transform_6, window_bounds = array<i64: 1, 256>}, {transform_indices = @transform_7, window_bounds = array<i64: 1, 4, 256>}]} {
    %c0 = arith.constant 0 : index
    %c0_0 = arith.constant 0 : index
    %c0_1 = arith.constant 0 : index
    %0 = vector.load %arg2[%c0, %c0_0, %c0_1] : memref<1x4x256xf32, #tpu.memory_space<vmem>>, vector<1x4x256xf32>
    %1 = vector.shape_cast %0 : vector<1x4x256xf32> to vector<4x256xf32>
    %c0_2 = arith.constant 0 : index
    %c0_3 = arith.constant 0 : index
    %2 = vector.load %arg3[%c0_2, %c0_3] : memref<4x9xf32, #tpu.memory_space<vmem>>, vector<4x9xf32>
    %c0_4 = arith.constant 0 : index
    %c0_5 = arith.constant 0 : index
    %3 = vector.load %arg7[%c0_4, %c0_5] : memref<1x256xi32, #tpu.memory_space<vmem>>, vector<1x256xi32>
    %c0_6 = arith.constant 0 : index
    %c0_7 = arith.constant 0 : index
    %4 = vector.load %arg8[%c0_6, %c0_7] : memref<1x256xi32, #tpu.memory_space<vmem>>, vector<1x256xi32>
    %c1_i32 = arith.constant 1 : i32
    %5 = vector.broadcast %c1_i32 : i32 to vector<1x256xi32>
    %6 = arith.cmpi sge, %3, %5 : vector<1x256xi32>
    %c1_i32_8 = arith.constant 1 : i32
    %7 = vector.broadcast %c1_i32_8 : i32 to vector<1x256xi32>
    %8 = arith.cmpi sge, %4, %7 : vector<1x256xi32>
    %c14_i32 = arith.constant 14 : i32
    %9 = vector.broadcast %c14_i32 : i32 to vector<1x256xi32>
    %10 = arith.cmpi sle, %3, %9 : vector<1x256xi32>
    %c14_i32_9 = arith.constant 14 : i32
    %11 = vector.broadcast %c14_i32_9 : i32 to vector<1x256xi32>
    %12 = arith.cmpi sle, %4, %11 : vector<1x256xi32>
    %13 = vector.extract_strided_slice %2 {offsets = [0, 4], sizes = [4, 1], strides = [1, 1]} : vector<4x9xf32> to vector<4x1xf32>
    %14 = vector.broadcast %13 : vector<4x1xf32> to vector<4x256xf32>
    %15 = arith.mulf %14, %1 : vector<4x256xf32>
    %c17_i32 = arith.constant 17 : i32
    %16 = tpu.dynamic_rotate %1 by %c17_i32 dim 1 : vector<4x256xf32>, i32 -> vector<4x256xf32>
    %17 = arith.andi %6, %8 : vector<1x256xi1>
    %cst = arith.constant 0.000000e+00 : f32
    %18 = vector.shape_cast %17 : vector<1x256xi1> to vector<1x256xi1>
    %19 = vector.broadcast %18 : vector<1x256xi1> to vector<4x256xi1>
    %20 = vector.broadcast %cst : f32 to vector<4x256xf32>
    %21 = arith.select %19, %16, %20 : vector<4x256xi1>, vector<4x256xf32>
    %22 = vector.extract_strided_slice %2 {offsets = [0, 0], sizes = [4, 1], strides = [1, 1]} : vector<4x9xf32> to vector<4x1xf32>
    %23 = vector.broadcast %22 : vector<4x1xf32> to vector<4x256xf32>
    %24 = arith.mulf %23, %21 : vector<4x256xf32>
    %25 = arith.addf %15, %24 : vector<4x256xf32>
    %c16_i32 = arith.constant 16 : i32
    %26 = tpu.dynamic_rotate %1 by %c16_i32 dim 1 : vector<4x256xf32>, i32 -> vector<4x256xf32>
    %cst_10 = arith.constant 0.000000e+00 : f32
    %27 = vector.shape_cast %6 : vector<1x256xi1> to vector<1x256xi1>
    %28 = vector.broadcast %27 : vector<1x256xi1> to vector<4x256xi1>
    %29 = vector.broadcast %cst_10 : f32 to vector<4x256xf32>
    %30 = arith.select %28, %26, %29 : vector<4x256xi1>, vector<4x256xf32>
    %31 = vector.extract_strided_slice %2 {offsets = [0, 1], sizes = [4, 1], strides = [1, 1]} : vector<4x9xf32> to vector<4x1xf32>
    %32 = vector.broadcast %31 : vector<4x1xf32> to vector<4x256xf32>
    %33 = arith.mulf %32, %30 : vector<4x256xf32>
    %34 = arith.addf %25, %33 : vector<4x256xf32>
    %c15_i32 = arith.constant 15 : i32
    %35 = tpu.dynamic_rotate %1 by %c15_i32 dim 1 : vector<4x256xf32>, i32 -> vector<4x256xf32>
    %36 = arith.andi %6, %12 : vector<1x256xi1>
    %cst_11 = arith.constant 0.000000e+00 : f32
    %37 = vector.shape_cast %36 : vector<1x256xi1> to vector<1x256xi1>
    %38 = vector.broadcast %37 : vector<1x256xi1> to vector<4x256xi1>
    %39 = vector.broadcast %cst_11 : f32 to vector<4x256xf32>
    %40 = arith.select %38, %35, %39 : vector<4x256xi1>, vector<4x256xf32>
    %41 = vector.extract_strided_slice %2 {offsets = [0, 2], sizes = [4, 1], strides = [1, 1]} : vector<4x9xf32> to vector<4x1xf32>
    %42 = vector.broadcast %41 : vector<4x1xf32> to vector<4x256xf32>
    %43 = arith.mulf %42, %40 : vector<4x256xf32>
    %44 = arith.addf %34, %43 : vector<4x256xf32>
    %c1_i32_12 = arith.constant 1 : i32
    %45 = tpu.dynamic_rotate %1 by %c1_i32_12 dim 1 : vector<4x256xf32>, i32 -> vector<4x256xf32>
    %cst_13 = arith.constant 0.000000e+00 : f32
    %46 = vector.shape_cast %8 : vector<1x256xi1> to vector<1x256xi1>
    %47 = vector.broadcast %46 : vector<1x256xi1> to vector<4x256xi1>
    %48 = vector.broadcast %cst_13 : f32 to vector<4x256xf32>
    %49 = arith.select %47, %45, %48 : vector<4x256xi1>, vector<4x256xf32>
    %50 = vector.extract_strided_slice %2 {offsets = [0, 3], sizes = [4, 1], strides = [1, 1]} : vector<4x9xf32> to vector<4x1xf32>
    %51 = vector.broadcast %50 : vector<4x1xf32> to vector<4x256xf32>
    %52 = arith.mulf %51, %49 : vector<4x256xf32>
    %53 = arith.addf %44, %52 : vector<4x256xf32>
    %c255_i32 = arith.constant 255 : i32
    %54 = tpu.dynamic_rotate %1 by %c255_i32 dim 1 : vector<4x256xf32>, i32 -> vector<4x256xf32>
    %cst_14 = arith.constant 0.000000e+00 : f32
    %55 = vector.shape_cast %12 : vector<1x256xi1> to vector<1x256xi1>
    %56 = vector.broadcast %55 : vector<1x256xi1> to vector<4x256xi1>
    %57 = vector.broadcast %cst_14 : f32 to vector<4x256xf32>
    %58 = arith.select %56, %54, %57 : vector<4x256xi1>, vector<4x256xf32>
    %59 = vector.extract_strided_slice %2 {offsets = [0, 5], sizes = [4, 1], strides = [1, 1]} : vector<4x9xf32> to vector<4x1xf32>
    %60 = vector.broadcast %59 : vector<4x1xf32> to vector<4x256xf32>
    %61 = arith.mulf %60, %58 : vector<4x256xf32>
    %62 = arith.addf %53, %61 : vector<4x256xf32>
    %c241_i32 = arith.constant 241 : i32
    %63 = tpu.dynamic_rotate %1 by %c241_i32 dim 1 : vector<4x256xf32>, i32 -> vector<4x256xf32>
    %64 = arith.andi %10, %8 : vector<1x256xi1>
    %cst_15 = arith.constant 0.000000e+00 : f32
    %65 = vector.shape_cast %64 : vector<1x256xi1> to vector<1x256xi1>
    %66 = vector.broadcast %65 : vector<1x256xi1> to vector<4x256xi1>
    %67 = vector.broadcast %cst_15 : f32 to vector<4x256xf32>
    %68 = arith.select %66, %63, %67 : vector<4x256xi1>, vector<4x256xf32>
    %69 = vector.extract_strided_slice %2 {offsets = [0, 6], sizes = [4, 1], strides = [1, 1]} : vector<4x9xf32> to vector<4x1xf32>
    %70 = vector.broadcast %69 : vector<4x1xf32> to vector<4x256xf32>
    %71 = arith.mulf %70, %68 : vector<4x256xf32>
    %72 = arith.addf %62, %71 : vector<4x256xf32>
    %c240_i32 = arith.constant 240 : i32
    %73 = tpu.dynamic_rotate %1 by %c240_i32 dim 1 : vector<4x256xf32>, i32 -> vector<4x256xf32>
    %cst_16 = arith.constant 0.000000e+00 : f32
    %74 = vector.shape_cast %10 : vector<1x256xi1> to vector<1x256xi1>
    %75 = vector.broadcast %74 : vector<1x256xi1> to vector<4x256xi1>
    %76 = vector.broadcast %cst_16 : f32 to vector<4x256xf32>
    %77 = arith.select %75, %73, %76 : vector<4x256xi1>, vector<4x256xf32>
    %78 = vector.extract_strided_slice %2 {offsets = [0, 7], sizes = [4, 1], strides = [1, 1]} : vector<4x9xf32> to vector<4x1xf32>
    %79 = vector.broadcast %78 : vector<4x1xf32> to vector<4x256xf32>
    %80 = arith.mulf %79, %77 : vector<4x256xf32>
    %81 = arith.addf %72, %80 : vector<4x256xf32>
    %c239_i32 = arith.constant 239 : i32
    %82 = tpu.dynamic_rotate %1 by %c239_i32 dim 1 : vector<4x256xf32>, i32 -> vector<4x256xf32>
    %83 = arith.andi %10, %12 : vector<1x256xi1>
    %cst_17 = arith.constant 0.000000e+00 : f32
    %84 = vector.shape_cast %83 : vector<1x256xi1> to vector<1x256xi1>
    %85 = vector.broadcast %84 : vector<1x256xi1> to vector<4x256xi1>
    %86 = vector.broadcast %cst_17 : f32 to vector<4x256xf32>
    %87 = arith.select %85, %82, %86 : vector<4x256xi1>, vector<4x256xf32>
    %88 = vector.extract_strided_slice %2 {offsets = [0, 8], sizes = [4, 1], strides = [1, 1]} : vector<4x9xf32> to vector<4x1xf32>
    %89 = vector.broadcast %88 : vector<4x1xf32> to vector<4x256xf32>
    %90 = arith.mulf %89, %87 : vector<4x256xf32>
    %91 = arith.addf %81, %90 : vector<4x256xf32>
    %c0_18 = arith.constant 0 : index
    %c0_19 = arith.constant 0 : index
    %92 = vector.load %arg4[%c0_18, %c0_19] : memref<4x1xf32, #tpu.memory_space<vmem>>, vector<4x1xf32>
    %93 = vector.broadcast %92 : vector<4x1xf32> to vector<4x256xf32>
    %94 = arith.addf %91, %93 : vector<4x256xf32>
    %cst_20 = arith.constant 5.000000e-01 : f32
    %95 = vector.broadcast %cst_20 : f32 to vector<4x256xf32>
    %96 = arith.mulf %95, %94 : vector<4x256xf32>
    %cst_21 = arith.constant 0.707106769 : f32
    %97 = vector.broadcast %cst_21 : f32 to vector<4x256xf32>
    %98 = arith.mulf %94, %97 : vector<4x256xf32>
    %99 = math.erf %98 : vector<4x256xf32>
    %cst_22 = arith.constant 1.000000e+00 : f32
    %100 = vector.broadcast %cst_22 : f32 to vector<4x256xf32>
    %101 = arith.addf %100, %99 : vector<4x256xf32>
    %102 = arith.mulf %96, %101 : vector<4x256xf32>
    %c0_23 = arith.constant 0 : index
    %c0_24 = arith.constant 0 : index
    %103 = vector.load %arg5[%c0_23, %c0_24] : memref<4x1xf32, #tpu.memory_space<vmem>>, vector<4x1xf32>
    %104 = vector.broadcast %103 : vector<4x1xf32> to vector<4x256xf32>
    %105 = arith.mulf %104, %102 : vector<4x256xf32>
    %c0_25 = arith.constant 0 : index
    %c0_26 = arith.constant 0 : index
    %106 = vector.load %arg6[%c0_25, %c0_26] : memref<4x1xf32, #tpu.memory_space<vmem>>, vector<4x1xf32>
    %107 = vector.broadcast %106 : vector<4x1xf32> to vector<4x256xf32>
    %108 = arith.addf %105, %107 : vector<4x256xf32>
    %109 = arith.addf %108, %1 : vector<4x256xf32>
    %c0_27 = arith.constant 0 : index
    %c0_28 = arith.constant 0 : index
    %c0_29 = arith.constant 0 : index
    %110 = vector.load %arg9[%c0_27, %c0_28, %c0_29] : memref<1x4x256xf32, #tpu.memory_space<vmem>>, vector<1x4x256xf32>
    %111 = vector.shape_cast %110 : vector<1x4x256xf32> to vector<4x256xf32>
    %112 = vector.shape_cast %109 : vector<4x256xf32> to vector<1x4x256xf32>
    tpu.vector_store %arg9[%c0_27, %c0_28, %c0_29], %112 {strides = array<i32>} : memref<1x4x256xf32, #tpu.memory_space<vmem>>, vector<1x4x256xf32>,
    return
  }
  func.func @transform_0(%arg0: i32, %arg1: i32) -> (i32, i32, i32) {
    %c0_i32 = arith.constant 0 : i32
    %c0_i32_0 = arith.constant 0 : i32
    return %arg0, %arg1, %c0_i32 : i32, i32, i32
  }
  func.func @transform_1(%arg0: i32, %arg1: i32) -> (i32, i32) {
    %c0_i32 = arith.constant 0 : i32
    %c0_i32_0 = arith.constant 0 : i32
    return %arg1, %c0_i32 : i32, i32
  }
  func.func @transform_2(%arg0: i32, %arg1: i32) -> (i32, i32) {
    %c0_i32 = arith.constant 0 : i32
    %c0_i32_0 = arith.constant 0 : i32
    return %arg1, %c0_i32 : i32, i32
  }
  func.func @transform_3(%arg0: i32, %arg1: i32) -> (i32, i32) {
    %c0_i32 = arith.constant 0 : i32
    %c0_i32_0 = arith.constant 0 : i32
    return %arg1, %c0_i32 : i32, i32
  }
  func.func @transform_4(%arg0: i32, %arg1: i32) -> (i32, i32) {
    %c0_i32 = arith.constant 0 : i32
    %c0_i32_0 = arith.constant 0 : i32
    return %arg1, %c0_i32 : i32, i32
  }
  func.func @transform_5(%arg0: i32, %arg1: i32) -> (i32, i32) {
    %c0_i32 = arith.constant 0 : i32
    %c0_i32_0 = arith.constant 0 : i32
    %c0_i32_1 = arith.constant 0 : i32
    return %c0_i32, %c0_i32_0 : i32, i32
  }
  func.func @transform_6(%arg0: i32, %arg1: i32) -> (i32, i32) {
    %c0_i32 = arith.constant 0 : i32
    %c0_i32_0 = arith.constant 0 : i32
    %c0_i32_1 = arith.constant 0 : i32
    return %c0_i32, %c0_i32_0 : i32, i32
  }
  func.func @transform_7(%arg0: i32, %arg1: i32) -> (i32, i32, i32) {
    %c0_i32 = arith.constant 0 : i32
    %c0_i32_0 = arith.constant 0 : i32
    return %arg0, %arg1, %c0_i32 : i32, i32, i32
  }
}

</mosaic_0001>

<llo_original>
// kernel: tpu_custom_call.1
$region0: #{tpu_custom_call.1}
  #allocation0 [shape = 'u32[]', space=smem, size = 0x4, offset = 0x4, fixed_abs, tag = 'smem constant byte address 0x4 - core index']
  #allocation1 [shape = 'u32[144,128]{1,0:T(1,128)}', space=vmem, size = 0x12000, scoped, tag = 'internal scratch']
  %s0 = inlined_call_operand.hbm [shape: f32[2,4,256], index: 0, kind: input, shape index: {}]
  %s1 = inlined_call_operand.vmem [shape: f32[4,9], index: 1, kind: input, shape index: {}]
  %s2 = inlined_call_operand.vmem [shape: f32[4,1], index: 2, kind: input, shape index: {}]
  %s3 = inlined_call_operand.vmem [shape: f32[4,1], index: 3, kind: input, shape index: {}]
  %s4 = inlined_call_operand.vmem [shape: f32[4,1], index: 4, kind: input, shape index: {}]
  %s5 = inlined_call_operand.vmem [shape: s32[1,256], index: 5, kind: input, shape index: {}]
  %s6 = inlined_call_operand.vmem [shape: s32[1,256], index: 6, kind: input, shape index: {}]
  %s7 = inlined_call_operand.hbm [shape: f32[2,4,256], index: 7, kind: output, shape index: {}]
  %s8 = sld [smem:[#allocation0]]
  $region65: #{tpu_custom_call.1} parent=0
    _
  %s10 = ssub.s32 1, %s8
  %s11 = scalar_select 0, %s10, %s8
  $region1: #{tpu_custom_call.1} parent=0
    #allocation2 [shape = 'u8[8192]{0}', space=vmem, size = 0x2000, scoped, tag = 'input window, operand 0']
    #allocation3 [shape = 's32[2]{0}', space=sflag, size = 0x8, scoped, tag = 'scoped memory for tpu_custom_call.1']
    #allocation4 [shape = 's32[2]{0}', space=sflag, size = 0x8, scoped, tag = 'scoped memory for tpu_custom_call.1']
    #allocation5 [shape = 'u8[8192]{0}', space=vmem, size = 0x2000, scoped, tag = 'output window, operand 0']
    %12 = vsyncpa [#allocation3], 0
    %s13 = scalar_lea.sflag [#allocation3], 1
    %14 = vsyncpa %s13, 0
    %15 = vsyncpa [#allocation4], 0
    %s16 = scalar_lea.sflag [#allocation4], 1
    %17 = vsyncpa %s16, 0
    loop: start=0, step=1, limit=4
    $region2: #{tpu_custom_call.1} parent=1 // loop_pre_header
      _
    $region3: #{tpu_custom_call.1} parent=1 // loop_header
      %s19 = sphi 0, %s23
      %p20 = scmp.ge.s32.totalorder %s19, 4
      %s26 = sphi 0, %s38
      %s27 = sphi 0, %s34
      %s28 = sphi 0, %s26
      %s29 = sphi 0, %s27
      %s30 = sphi 0, %s28
      %s31 = sphi 0, %s29
      %s43 = sphi 0, %s45
      %s46 = sphi 0, %s43
      %s47 = sphi 0, %s46
      %s63 = sphi 0, %s47
      %s69 = sphi 0, %s71
      %s72 = sphi 0, %s69
      %s73 = sphi 0, %s72
      %s89 = sphi 0, %s73
      %s95 = sphi 0, %s97
      %s98 = sphi 0, %s95
      %s99 = sphi 0, %s98
      %s115 = sphi 0, %s99
      %s121 = sphi 0, %s123
      %s124 = sphi 0, %s121
      %s125 = sphi 0, %s124
      %s141 = sphi 0, %s125
      %s147 = sphi 0, %s149
      %s150 = sphi 0, %s147
      %s151 = sphi 0, %s150
      %s167 = sphi 0, %s151
      %s171 = sphi 0, %s171
      %s173 = sphi 0, %s171
      %s174 = sphi 0, %s173
      %s188 = sphi 0, %s174
      %s192 = sphi 0, %s192
      %s194 = sphi 0, %s192
      %s195 = sphi 0, %s194
      %s209 = sphi 0, %s195
      %s217 = sphi 0, %s219
      %s220 = sphi 0, %s217
      %s221 = sphi 0, %s220
      %s237 = sphi 0, %s221
    $region4: #{tpu_custom_call.1} parent=1 // loop_header_branch
      %22 = sbr.rel (%p20) target = $region8
    $region5: #{tpu_custom_call.1} parent=1 // loop_body
      %s24 = ssub.s32 %s19, 1
      %s25 = ssub.s32 %s19, 2
      %s32 = sadd.s32 1, %s27
      %p33 = scmp.ge.s32.totalorder %s32, 1
      %s34 = scalar_select %p33, 0, %s32
      %s35 = sadd.s32 1, %s26
      %s36 = scalar_select %p33, %s35, %s26
      %p37 = scmp.ge.s32.totalorder %s36, 2
      %s38 = scalar_select %p37, 0, %s36
      %s39 = ssub.s32 %s26, %s38
      %s40 = ssub.s32 %s27, %s34
      %s41 = sor.u32 %s39, %s40
      %p42 = scmp.eq.s32.totalorder %s41, 0
      %s44 = sadd.s32 %s43, 1
      %s45 = scalar_select %p42, %s43, %s44
      %p48 = pneg %p42
      %p49 = scmp.eq.s32.totalorder %s19, 1
      %p50 = por %p48, %p49
      %p51 = scmp.ne.s32.totalorder %s43, %s46
      %p52 = scmp.eq.s32.totalorder %s19, 0
      %p53 = por %p51, %p52
      %p54 = scmp.ne.s32.totalorder %s43, %s46
      %p55 = scmp.eq.s32.totalorder %s24, 1
      %p56 = por %p54, %p55
      %p57 = scmp.ne.s32.totalorder %s46, %s47
      %p58 = scmp.eq.s32.totalorder %s24, 0
      %p59 = por %p57, %p58
      %p60 = scmp.ne.s32.totalorder %s46, %s47
      %p61 = scmp.eq.s32.totalorder %s25, 1
      %p62 = por %p60, %p61
      %p64 = scmp.ne.s32.totalorder %s47, %s63
      %p65 = scmp.eq.s32.totalorder %s25, 0
      %p66 = por %p64, %p65
      %s67 = ssub.s32 %s27, %s34
      %p68 = scmp.eq.s32.totalorder %s67, 0
      %s70 = sadd.s32 %s69, 1
      %s71 = scalar_select %p68, %s69, %s70
      %p74 = pneg %p68
      %p75 = scmp.eq.s32.totalorder %s19, 1
      %p76 = por %p74, %p75
      %p77 = scmp.ne.s32.totalorder %s69, %s72
      %p78 = scmp.eq.s32.totalorder %s19, 0
      %p79 = por %p77, %p78
      %p80 = scmp.ne.s32.totalorder %s69, %s72
      %p81 = scmp.eq.s32.totalorder %s24, 1
      %p82 = por %p80, %p81
      %p83 = scmp.ne.s32.totalorder %s72, %s73
      %p84 = scmp.eq.s32.totalorder %s24, 0
      %p85 = por %p83, %p84
      %p86 = scmp.ne.s32.totalorder %s72, %s73
      %p87 = scmp.eq.s32.totalorder %s25, 1
      %p88 = por %p86, %p87
      %p90 = scmp.ne.s32.totalorder %s73, %s89
      %p91 = scmp.eq.s32.totalorder %s25, 0
      %p92 = por %p90, %p91
      %s93 = ssub.s32 %s27, %s34
      %p94 = scmp.eq.s32.totalorder %s93, 0
      %s96 = sadd.s32 %s95, 1
      %s97 = scalar_select %p94, %s95, %s96
      %p100 = pneg %p94
      %p101 = scmp.eq.s32.totalorder %s19, 1
      %p102 = por %p100, %p101
      %p103 = scmp.ne.s32.totalorder %s95, %s98
      %p104 = scmp.eq.s32.totalorder %s19, 0
      %p105 = por %p103, %p104
      %p106 = scmp.ne.s32.totalorder %s95, %s98
      %p107 = scmp.eq.s32.totalorder %s24, 1
      %p108 = por %p106, %p107
      %p109 = scmp.ne.s32.totalorder %s98, %s99
      %p110 = scmp.eq.s32.totalorder %s24, 0
      %p111 = por %p109, %p110
      %p112 = scmp.ne.s32.totalorder %s98, %s99
      %p113 = scmp.eq.s32.totalorder %s25, 1
      %p114 = por %p112, %p113
      %p116 = scmp.ne.s32.totalorder %s99, %s115
      %p117 = scmp.eq.s32.totalorder %s25, 0
      %p118 = por %p116, %p117
      %s119 = ssub.s32 %s27, %s34
      %p120 = scmp.eq.s32.totalorder %s119, 0
      %s122 = sadd.s32 %s121, 1
      %s123 = scalar_select %p120, %s121, %s122
      %p126 = pneg %p120
      %p127 = scmp.eq.s32.totalorder %s19, 1
      %p128 = por %p126, %p127
      %p129 = scmp.ne.s32.totalorder %s121, %s124
      %p130 = scmp.eq.s32.totalorder %s19, 0
      %p131 = por %p129, %p130
      %p132 = scmp.ne.s32.totalorder %s121, %s124
      %p133 = scmp.eq.s32.totalorder %s24, 1
      %p134 = por %p132, %p133
      %p135 = scmp.ne.s32.totalorder %s124, %s125
      %p136 = scmp.eq.s32.totalorder %s24, 0
      %p137 = por %p135, %p136
      %p138 = scmp.ne.s32.totalorder %s124, %s125
      %p139 = scmp.eq.s32.totalorder %s25, 1
      %p140 = por %p138, %p139
      %p142 = scmp.ne.s32.totalorder %s125, %s141
      %p143 = scmp.eq.s32.totalorder %s25, 0
      %p144 = por %p142, %p143
      %s145 = ssub.s32 %s27, %s34
      %p146 = scmp.eq.s32.totalorder %s145, 0
      %s148 = sadd.s32 %s147, 1
      %s149 = scalar_select %p146, %s147, %s148
      %p152 = pneg %p146
      %p153 = scmp.eq.s32.totalorder %s19, 1
      %p154 = por %p152, %p153
      %p155 = scmp.ne.s32.totalorder %s147, %s150
      %p156 = scmp.eq.s32.totalorder %s19, 0
      %p157 = por %p155, %p156
      %p158 = scmp.ne.s32.totalorder %s147, %s150
      %p159 = scmp.eq.s32.totalorder %s24, 1
      %p160 = por %p158, %p159
      %p161 = scmp.ne.s32.totalorder %s150, %s151
      %p162 = scmp.eq.s32.totalorder %s24, 0
      %p163 = por %p161, %p162
      %p164 = scmp.ne.s32.totalorder %s150, %s151
      %p165 = scmp.eq.s32.totalorder %s25, 1
      %p166 = por %p164, %p165
      %p168 = scmp.ne.s32.totalorder %s151, %s167
      %p169 = scmp.eq.s32.totalorder %s25, 0
      %p170 = por %p168, %p169
      %s172 = sadd.s32 %s171, 1
      %p175 = scmp.eq.s32.totalorder %s19, 1
      %p176 = scmp.ne.s32.totalorder %s171, %s173
      %p177 = scmp.eq.s32.totalorder %s19, 0
      %p178 = por %p176, %p177
      %p179 = scmp.ne.s32.totalorder %s171, %s173
      %p180 = scmp.eq.s32.totalorder %s24, 1
      %p181 = por %p179, %p180
      %p182 = scmp.ne.s32.totalorder %s173, %s174
      %p183 = scmp.eq.s32.totalorder %s24, 0
      %p184 = por %p182, %p183
      %p185 = scmp.ne.s32.totalorder %s173, %s174
      %p186 = scmp.eq.s32.totalorder %s25, 1
      %p187 = por %p185, %p186
      %p189 = scmp.ne.s32.totalorder %s174, %s188
      %p190 = scmp.eq.s32.totalorder %s25, 0
      %p191 = por %p189, %p190
      %s193 = sadd.s32 %s192, 1
      %p196 = scmp.eq.s32.totalorder %s19, 1
      %p197 = scmp.ne.s32.totalorder %s192, %s194
      %p198 = scmp.eq.s32.totalorder %s19, 0
      %p199 = por %p197, %p198
      %p200 = scmp.ne.s32.totalorder %s192, %s194
      %p201 = scmp.eq.s32.totalorder %s24, 1
      %p202 = por %p200, %p201
      %p203 = scmp.ne.s32.totalorder %s194, %s195
      %p204 = scmp.eq.s32.totalorder %s24, 0
      %p205 = por %p203, %p204
      %p206 = scmp.ne.s32.totalorder %s194, %s195
      %p207 = scmp.eq.s32.totalorder %s25, 1
      %p208 = por %p206, %p207
      %p210 = scmp.ne.s32.totalorder %s195, %s209
      %p211 = scmp.eq.s32.totalorder %s25, 0
      %p212 = por %p210, %p211
      %s213 = ssub.s32 %s26, %s38
      %s214 = ssub.s32 %s27, %s34
      %s215 = sor.u32 %s213, %s214
      %p216 = scmp.eq.s32.totalorder %s215, 0
      %s218 = sadd.s32 %s217, 1
      %s219 = scalar_select %p216, %s217, %s218
      %p222 = pneg %p216
      %p223 = scmp.eq.s32.totalorder %s19, 1
      %p224 = por %p222, %p223
      %p225 = scmp.ne.s32.totalorder %s217, %s220
      %p226 = scmp.eq.s32.totalorder %s19, 0
      %p227 = por %p225, %p226
      %p228 = scmp.ne.s32.totalorder %s217, %s220
      %p229 = scmp.eq.s32.totalorder %s24, 1
      %p230 = por %p228, %p229
      %p231 = scmp.ne.s32.totalorder %s220, %s221
      %p232 = scmp.eq.s32.totalorder %s24, 0
      %p233 = por %p231, %p232
      %p234 = scmp.ne.s32.totalorder %s220, %s221
      %p235 = scmp.eq.s32.totalorder %s25, 1
      %p236 = por %p234, %p235
      %p238 = scmp.ne.s32.totalorder %s221, %s237
      %p239 = scmp.eq.s32.totalorder %s25, 0
      %p240 = por %p238, %p239
      %p241 = scmp.le.s32.totalorder 1, %s19
      %p242 = scmp.lt.s32.totalorder %s19, 3
      %p243 = pnand %p241, %p242
      %p244 = pneg %p243
      // Predicated region
      $region9: #{tpu_custom_call.1} parent=5 // pred_check
        _
      $region10: #{tpu_custom_call.1} parent=5 // pred_check_branch
        %246 = sbr.rel (%p243) target = $region12
      $region11: #{tpu_custom_call.1} parent=5 // pred_region
        %s247 = ssub.s32 %s19, 1
        // Predicated region
        $region13: #{tpu_custom_call.1} parent=11 // pred_check
          %p248 = pneg %p85
        $region14: #{tpu_custom_call.1} parent=11 // pred_check_branch
          %250 = sbr.rel (%p248) target = $region16
        $region15: #{tpu_custom_call.1} parent=11 // pred_region
          %p251 = scmp.lt.s32.totalorder %s29, 0
          %s252 = scalar_select %p251, %s29, 0
          %s253 = smul.addr %s252, 4
          %s254 = scalar_lea.vmem %s1, %s253
        $region16: #{tpu_custom_call.1} parent=11 // pred_fallthru
          _
        // Predicated region
        $region17: #{tpu_custom_call.1} parent=11 // pred_check
          %p255 = pneg %p111
        $region18: #{tpu_custom_call.1} parent=11 // pred_check_branch
          %257 = sbr.rel (%p255) target = $region20
        $region19: #{tpu_custom_call.1} parent=11 // pred_region
          %p258 = scmp.lt.s32.totalorder %s29, 0
          %s259 = scalar_select %p258, %s29, 0
          %s260 = smul.addr %s259, 4
          %s261 = scalar_lea.vmem %s2, %s260
        $region20: #{tpu_custom_call.1} parent=11 // pred_fallthru
          _
        // Predicated region
        $region21: #{tpu_custom_call.1} parent=11 // pred_check
          %p262 = pneg %p137
        $region22: #{tpu_custom_call.1} parent=11 // pred_check_branch
          %264 = sbr.rel (%p262) target = $region24
        $region23: #{tpu_custom_call.1} parent=11 // pred_region
          %p265 = scmp.lt.s32.totalorder %s29, 0
          %s266 = scalar_select %p265, %s29, 0
          %s267 = smul.addr %s266, 4
          %s268 = scalar_lea.vmem %s3, %s267
        $region24: #{tpu_custom_call.1} parent=11 // pred_fallthru
          _
        // Predicated region
        $region25: #{tpu_custom_call.1} parent=11 // pred_check
          %p269 = pneg %p163
        $region26: #{tpu_custom_call.1} parent=11 // pred_check_branch
          %271 = sbr.rel (%p269) target = $region28
        $region27: #{tpu_custom_call.1} parent=11 // pred_region
          %p272 = scmp.lt.s32.totalorder %s29, 0
          %s273 = scalar_select %p272, %s29, 0
          %s274 = smul.addr %s273, 4
          %s275 = scalar_lea.vmem %s4, %s274
        $region28: #{tpu_custom_call.1} parent=11 // pred_fallthru
          _
        // Predicated region
        $region29: #{tpu_custom_call.1} parent=11 // pred_check
          %p276 = pneg %p184
        $region30: #{tpu_custom_call.1} parent=11 // pred_check_branch
          %278 = sbr.rel (%p276) target = $region32
        $region31: #{tpu_custom_call.1} parent=11 // pred_region
          _
        $region32: #{tpu_custom_call.1} parent=11 // pred_fallthru
          _
        // Predicated region
        $region33: #{tpu_custom_call.1} parent=11 // pred_check
          %p279 = pneg %p205
        $region34: #{tpu_custom_call.1} parent=11 // pred_check_branch
          %281 = sbr.rel (%p279) target = $region36
        $region35: #{tpu_custom_call.1} parent=11 // pred_region
          _
        $region36: #{tpu_custom_call.1} parent=11 // pred_fallthru
          _
      $region12: #{tpu_custom_call.1} parent=5 // pred_fallthru
        _
      %p282 = scmp.lt.s32.totalorder %s19, 2
      // Predicated region
      $region37: #{tpu_custom_call.1} parent=5 // pred_check
        %p283 = pneg %p282
      $region38: #{tpu_custom_call.1} parent=5 // pred_check_branch
        %285 = sbr.rel (%p283) target = $region40
      $region39: #{tpu_custom_call.1} parent=5 // pred_region
        // Predicated region
        $region41: #{tpu_custom_call.1} parent=39 // pred_check
          %p286 = pneg %p53
        $region42: #{tpu_custom_call.1} parent=39 // pred_check_branch
          %288 = sbr.rel (%p286) target = $region44
        $region43: #{tpu_custom_call.1} parent=39 // pred_region
          %s289 = sand.u32 %s43, 1
          %s290 = scalar_lea.sflag [#allocation3], %s289
          %s291 = sand.u32 %s43, 1
          %s292 = smul.addr %s291, 8
          %s293 = scalar_lea.vmem [#allocation2], %s292
          %s295 = ssub.s32 128, 128
          %296 = vsyncadd %s290, %s295
          %s297 = smul.addr %s27, 2
          %s298 = smul.addr %s26, 2
          %s299 = sadd.s32 %s297, %s298
          %s300 = smul.addr %s299, 64
          %s301 = scalar_lea.hbm %s0, %s300
          %s303 = sshll.u32 %s293, 4
          %s304 = int_to_ptr.vmem [resolvable:$true] %s303
          %306 = dma.hbm_to_vmem [thread:$0]  %s301, 128, %s304, %s290
        $region44: #{tpu_custom_call.1} parent=39 // pred_fallthru
          _
      $region40: #{tpu_custom_call.1} parent=5 // pred_fallthru
        _
      %p307 = scmp.le.s32.totalorder 1, %s19
      %p308 = scmp.lt.s32.totalorder %s19, 3
      %p309 = pnand %p307, %p308
      %p310 = pneg %p309
      // Predicated region
      $region45: #{tpu_custom_call.1} parent=5 // pred_check
        _
      $region46: #{tpu_custom_call.1} parent=5 // pred_check_branch
        %312 = sbr.rel (%p309) target = $region48
      $region47: #{tpu_custom_call.1} parent=5 // pred_region
        %s313 = ssub.s32 %s19, 1
        %s314 = sand.u32 %s46, 1
        %s315 = scalar_lea.sflag [#allocation3], %s314
        %s316 = sand.u32 %s46, 1
        %s317 = smul.addr %s316, 8
        %s318 = scalar_lea.vmem [#allocation2], %s317
        // Predicated region
        $region49: #{tpu_custom_call.1} parent=47 // pred_check
          %p319 = pneg %p59
        $region50: #{tpu_custom_call.1} parent=47 // pred_check_branch
          %321 = sbr.rel (%p319) target = $region52
        $region51: #{tpu_custom_call.1} parent=47 // pred_region
          %322 = dma.done %s315, 128
        $region52: #{tpu_custom_call.1} parent=47 // pred_fallthru
          _
        %s323 = sand.u32 %s46, 1
        %s324 = scalar_lea.sflag [#allocation3], %s323
        %s325 = sand.u32 %s46, 1
        %s326 = smul.addr %s325, 8
        %s327 = scalar_lea.vmem [#allocation2], %s326
        %p328 = pneg %p59
        %p329 = pneg %p56
        %p330 = scmp.lt.s32.totalorder %s29, 0
        %s331 = scalar_select %p330, %s29, 0
        %s332 = smul.addr %s331, 4
        %s333 = scalar_lea.vmem %s1, %s332
        %p334 = pneg %p85
        %p335 = pneg %p82
        %p336 = scmp.lt.s32.totalorder %s29, 0
        %s337 = scalar_select %p336, %s29, 0
        %s338 = smul.addr %s337, 4
        %s339 = scalar_lea.vmem %s2, %s338
        %p340 = pneg %p111
        %p341 = pneg %p108
        %p342 = scmp.lt.s32.totalorder %s29, 0
        %s343 = scalar_select %p342, %s29, 0
        %s344 = smul.addr %s343, 4
        %s345 = scalar_lea.vmem %s3, %s344
        %p346 = pneg %p137
        %p347 = pneg %p134
        %p348 = scmp.lt.s32.totalorder %s29, 0
        %s349 = scalar_select %p348, %s29, 0
        %s350 = smul.addr %s349, 4
        %s351 = scalar_lea.vmem %s4, %s350
        %p352 = pneg %p163
        %p353 = pneg %p160
        %p354 = pneg %p184
        %p355 = pneg %p181
        %p356 = pneg %p205
        %p357 = pneg %p202
        %p358 = pneg %p233
        %p359 = pneg %p230
        %s360 = sand.u32 %s220, 1
        %s361 = scalar_lea.sflag [#allocation4], %s360
        %s362 = sand.u32 %s220, 1
        %s363 = smul.addr %s362, 8
        %s364 = scalar_lea.vmem [#allocation5], %s363
        %p365 = scmp.lt.s32.totalorder %s29, 0
        %s366 = scalar_select %p365, %s29, 0
        %s367 = smul.addr %s366, 4
        %s368 = scalar_lea.vmem %s1, %s367
        %p369 = scmp.lt.s32.totalorder %s29, 0
        %s370 = scalar_select %p369, %s29, 0
        %s371 = smul.addr %s370, 4
        %s372 = scalar_lea.vmem %s2, %s371
        %p373 = scmp.lt.s32.totalorder %s29, 0
        %s374 = scalar_select %p373, %s29, 0
        %s375 = smul.addr %s374, 4
        %s376 = scalar_lea.vmem %s3, %s375
        %p377 = scmp.lt.s32.totalorder %s29, 0
        %s378 = scalar_select %p377, %s29, 0
        %s379 = smul.addr %s378, 4
        %s380 = scalar_lea.vmem %s4, %s379
        %v381 = vld [vmem:[%s318] sm:$0xff]
        %v382 = vld [vmem:[%s368] sm:$0xf]
        %v383 = vld [vmem:[%s5] sm:$0x3]
        %v384 = vld [vmem:[%s6] sm:$0x3]
        %vm385 = vcmp.ge.s32.totalorder %v383, 1
        %vm386 = vcmp.ge.s32.totalorder %v384, 1
        %vm387 = vcmp.le.s32.totalorder %v383, 14
        %vm388 = vcmp.le.s32.totalorder %v384, 14
        %390 = vset.pattern.permute.xlu0 4
        %391 = vperm.xlu0 %390, %v382
        %v392 = vpop.permute.xlu0 %391
        %v395 = vcombine.high %v381, %v381
        %v397 = vmul.f32 %v392, %v381
        %v398 = vmul.f32 %v392, %v395
        %399 = vrot.lane.b32.xlu0 %v381, 17
        %v400 = vpop.permute.xlu0 %399
        %401 = vrot.lane.b32.xlu0 %v395, 17
        %v402 = vpop.permute.xlu0 %401
        %v403 = vlaneseq
        %v404 = vand.u32 %v403, 127
        %vm405 = vcmp.lt.s32.totalorder %v404, 17
        %v406 = vsel %vm405, %v400, %v402
        %v407 = vsel %vm405, %v402, %v400
        %vm408 = vmand %vm385, %vm386
        %v409 = vsel %vm408, 1, 0
        %v410 = vlaneseq
        %v411 = vshrl.u32 %v410, 7
        %v412 = vsub.s32 0, %v411
        %v413 = vrot.slane %v409, %v412
        %v414 = vlaneseq
        %v415 = vshrl.u32 %v414, 7
        %v416 = vsub.s32 1, %v415
        %v417 = vrot.slane %v409, %v416
        %vm418 = vcmp.eq.s32.totalorder %v413, 1
        %vm419 = vcmp.eq.s32.totalorder %v417, 1
        %v420 = vsel %vm418, %v407, 0.0
        %v421 = vsel %vm419, %v406, 0.0
        %422 = vset.pattern.permute.xlu0 0
        %423 = vperm.xlu0 %422, %v382
        %v424 = vpop.permute.xlu0 %423
        %v426 = vmul.f32 %v424, %v420
        %v427 = vmul.f32 %v424, %v421
        %v428 = vadd.f32 %v397, %v426
        %v429 = vadd.f32 %v398, %v427
        %430 = vrot.lane.b32.xlu0 %v381, 16
        %v431 = vpop.permute.xlu0 %430
        %432 = vrot.lane.b32.xlu0 %v395, 16
        %v433 = vpop.permute.xlu0 %432
        %vm434 = vcmp.lt.s32.totalorder %v404, 16
        %v435 = vsel %vm434, %v431, %v433
        %v436 = vsel %vm434, %v433, %v431
        %v437 = vsel %vm385, 1, 0
        %v438 = vlaneseq
        %v439 = vshrl.u32 %v438, 7
        %v440 = vsub.s32 0, %v439
        %v441 = vrot.slane %v437, %v440
        %v442 = vlaneseq
        %v443 = vshrl.u32 %v442, 7
        %v444 = vsub.s32 1, %v443
        %v445 = vrot.slane %v437, %v444
        %vm446 = vcmp.eq.s32.totalorder %v441, 1
        %vm447 = vcmp.eq.s32.totalorder %v445, 1
        %v448 = vsel %vm446, %v436, 0.0
        %v449 = vsel %vm447, %v435, 0.0
        %450 = vset.pattern.permute.xlu0 1
        %451 = vperm.xlu0 %450, %v382
        %v452 = vpop.permute.xlu0 %451
        %v454 = vmul.f32 %v452, %v448
        %v455 = vmul.f32 %v452, %v449
        %v456 = vadd.f32 %v428, %v454
        %v457 = vadd.f32 %v429, %v455
        %458 = vrot.lane.b32.xlu0 %v381, 15
        %v459 = vpop.permute.xlu0 %458
        %460 = vrot.lane.b32.xlu0 %v395, 15
        %v461 = vpop.permute.xlu0 %460
        %vm462 = vcmp.lt.s32.totalorder %v404, 15
        %v463 = vsel %vm462, %v459, %v461
        %v464 = vsel %vm462, %v461, %v459
        %vm465 = vmand %vm385, %vm388
        %v466 = vsel %vm465, 1, 0
        %v467 = vlaneseq
        %v468 = vshrl.u32 %v467, 7
        %v469 = vsub.s32 0, %v468
        %v470 = vrot.slane %v466, %v469
        %v471 = vlaneseq
        %v472 = vshrl.u32 %v471, 7
        %v473 = vsub.s32 1, %v472
        %v474 = vrot.slane %v466, %v473
        %vm475 = vcmp.eq.s32.totalorder %v470, 1
        %vm476 = vcmp.eq.s32.totalorder %v474, 1
        %v477 = vsel %vm475, %v464, 0.0
        %v478 = vsel %vm476, %v463, 0.0
        %479 = vset.pattern.permute.xlu0 2
        %480 = vperm.xlu0 %479, %v382
        %v481 = vpop.permute.xlu0 %480
        %v483 = vmul.f32 %v481, %v477
        %v484 = vmul.f32 %v481, %v478
        %v485 = vadd.f32 %v456, %v483
        %v486 = vadd.f32 %v457, %v484
        %487 = vrot.lane.b32.xlu0 %v381, 1
        %v488 = vpop.permute.xlu0 %487
        %489 = vrot.lane.b32.xlu0 %v395, 1
        %v490 = vpop.permute.xlu0 %489
        %vm491 = vcmp.lt.s32.totalorder %v404, 1
        %v492 = vsel %vm491, %v488, %v490
        %v493 = vsel %vm491, %v490, %v488
        %v494 = vsel %vm386, 1, 0
        %v495 = vlaneseq
        %v496 = vshrl.u32 %v495, 7
        %v497 = vsub.s32 0, %v496
        %v498 = vrot.slane %v494, %v497
        %v499 = vlaneseq
        %v500 = vshrl.u32 %v499, 7
        %v501 = vsub.s32 1, %v500
        %v502 = vrot.slane %v494, %v501
        %vm503 = vcmp.eq.s32.totalorder %v498, 1
        %vm504 = vcmp.eq.s32.totalorder %v502, 1
        %v505 = vsel %vm503, %v493, 0.0
        %v506 = vsel %vm504, %v492, 0.0
        %507 = vset.pattern.permute.xlu0 3
        %508 = vperm.xlu0 %507, %v382
        %v509 = vpop.permute.xlu0 %508
        %v511 = vmul.f32 %v509, %v505
        %v512 = vmul.f32 %v509, %v506
        %v513 = vadd.f32 %v485, %v511
        %v514 = vadd.f32 %v486, %v512
        %515 = vrot.lane.b32.xlu0 %v381, 127
        %v516 = vpop.permute.xlu0 %515
        %517 = vrot.lane.b32.xlu0 %v395, 127
        %v518 = vpop.permute.xlu0 %517
        %vm519 = vcmp.lt.s32.totalorder %v404, 127
        %v520 = vsel %vm519, %v516, %v518
        %v521 = vsel %vm519, %v518, %v516
        %v522 = vsel %vm388, 1, 0
        %v523 = vlaneseq
        %v524 = vshrl.u32 %v523, 7
        %v525 = vsub.s32 0, %v524
        %v526 = vrot.slane %v522, %v525
        %v527 = vlaneseq
        %v528 = vshrl.u32 %v527, 7
        %v529 = vsub.s32 1, %v528
        %v530 = vrot.slane %v522, %v529
        %vm531 = vcmp.eq.s32.totalorder %v526, 1
        %vm532 = vcmp.eq.s32.totalorder %v530, 1
        %v533 = vsel %vm531, %v520, 0.0
        %v534 = vsel %vm532, %v521, 0.0
        %535 = vset.pattern.permute.xlu0 5
        %536 = vperm.xlu0 %535, %v382
        %v537 = vpop.permute.xlu0 %536
        %v539 = vmul.f32 %v537, %v533
        %v540 = vmul.f32 %v537, %v534
        %v541 = vadd.f32 %v513, %v539
        %v542 = vadd.f32 %v514, %v540
        %543 = vrot.lane.b32.xlu0 %v381, 113
        %v544 = vpop.permute.xlu0 %543
        %545 = vrot.lane.b32.xlu0 %v395, 113
        %v546 = vpop.permute.xlu0 %545
        %vm547 = vcmp.lt.s32.totalorder %v404, 113
        %v548 = vsel %vm547, %v544, %v546
        %v549 = vsel %vm547, %v546, %v544
        %vm550 = vmand %vm387, %vm386
        %v551 = vsel %vm550, 1, 0
        %v552 = vlaneseq
        %v553 = vshrl.u32 %v552, 7
        %v554 = vsub.s32 0, %v553
        %v555 = vrot.slane %v551, %v554
        %v556 = vlaneseq
        %v557 = vshrl.u32 %v556, 7
        %v558 = vsub.s32 1, %v557
        %v559 = vrot.slane %v551, %v558
        %vm560 = vcmp.eq.s32.totalorder %v555, 1
        %vm561 = vcmp.eq.s32.totalorder %v559, 1
        %v562 = vsel %vm560, %v548, 0.0
        %v563 = vsel %vm561, %v549, 0.0
        %564 = vset.pattern.permute.xlu0 6
        %565 = vperm.xlu0 %564, %v382
        %v566 = vpop.permute.xlu0 %565
        %v568 = vmul.f32 %v566, %v562
        %v569 = vmul.f32 %v566, %v563
        %v570 = vadd.f32 %v541, %v568
        %v571 = vadd.f32 %v542, %v569
        %572 = vrot.lane.b32.xlu0 %v381, 112
        %v573 = vpop.permute.xlu0 %572
        %574 = vrot.lane.b32.xlu0 %v395, 112
        %v575 = vpop.permute.xlu0 %574
        %vm576 = vcmp.lt.s32.totalorder %v404, 112
        %v577 = vsel %vm576, %v573, %v575
        %v578 = vsel %vm576, %v575, %v573
        %v579 = vsel %vm387, 1, 0
        %v580 = vlaneseq
        %v581 = vshrl.u32 %v580, 7
        %v582 = vsub.s32 0, %v581
        %v583 = vrot.slane %v579, %v582
        %v584 = vlaneseq
        %v585 = vshrl.u32 %v584, 7
        %v586 = vsub.s32 1, %v585
        %v587 = vrot.slane %v579, %v586
        %vm588 = vcmp.eq.s32.totalorder %v583, 1
        %vm589 = vcmp.eq.s32.totalorder %v587, 1
        %v590 = vsel %vm588, %v577, 0.0
        %v591 = vsel %vm589, %v578, 0.0
        %592 = vset.pattern.permute.xlu0 7
        %593 = vperm.xlu0 %592, %v382
        %v594 = vpop.permute.xlu0 %593
        %v596 = vmul.f32 %v594, %v590
        %v597 = vmul.f32 %v594, %v591
        %v598 = vadd.f32 %v570, %v596
        %v599 = vadd.f32 %v571, %v597
        %600 = vrot.lane.b32.xlu0 %v381, 111
        %v601 = vpop.permute.xlu0 %600
        %602 = vrot.lane.b32.xlu0 %v395, 111
        %v603 = vpop.permute.xlu0 %602
        %vm604 = vcmp.lt.s32.totalorder %v404, 111
        %v605 = vsel %vm604, %v601, %v603
        %v606 = vsel %vm604, %v603, %v601
        %vm607 = vmand %vm387, %vm388
        %v608 = vsel %vm607, 1, 0
        %v609 = vlaneseq
        %v610 = vshrl.u32 %v609, 7
        %v611 = vsub.s32 0, %v610
        %v612 = vrot.slane %v608, %v611
        %v613 = vlaneseq
        %v614 = vshrl.u32 %v613, 7
        %v615 = vsub.s32 1, %v614
        %v616 = vrot.slane %v608, %v615
        %vm617 = vcmp.eq.s32.totalorder %v612, 1
        %vm618 = vcmp.eq.s32.totalorder %v616, 1
        %v619 = vsel %vm617, %v605, 0.0
        %v620 = vsel %vm618, %v606, 0.0
        %621 = vset.pattern.permute.xlu0 8
        %622 = vperm.xlu0 %621, %v382
        %v623 = vpop.permute.xlu0 %622
        %v625 = vmul.f32 %v623, %v619
        %v626 = vmul.f32 %v623, %v620
        %v627 = vadd.f32 %v598, %v625
        %v628 = vadd.f32 %v599, %v626
        %v629 = vld [vmem:[%s372] sm:$0xf]
        %631 = vset.pattern.permute.xlu0 0
        %632 = vperm.xlu0 %631, %v629
        %v633 = vpop.permute.xlu0 %632
        %v635 = vadd.f32 %v627, %v633
        %v636 = vadd.f32 %v628, %v633
        %v637 = vmul.f32 %v635, 0.5
        %v638 = vmul.f32 %v636, 0.5
        %v639 = vmul.f32 %v635, 0.70710677
        %v640 = vmul.f32 %v636, 0.70710677
        %v641 = verf.f32.pop %v639
        %v642 = verf.f32.pop %v640
        %v643 = vadd.f32 %v641, 1.0
        %v644 = vadd.f32 %v642, 1.0
        %v645 = vmul.f32 %v637, %v643
        %v646 = vmul.f32 %v638, %v644
        %v647 = vld [vmem:[%s376] sm:$0xf]
        %649 = vset.pattern.permute.xlu0 0
        %650 = vperm.xlu0 %649, %v647
        %v651 = vpop.permute.xlu0 %650
        %v653 = vmul.f32 %v651, %v645
        %v654 = vmul.f32 %v651, %v646
        %v655 = vld [vmem:[%s380] sm:$0xf]
        %657 = vset.pattern.permute.xlu0 0
        %658 = vperm.xlu0 %657, %v655
        %v659 = vpop.permute.xlu0 %658
        %v661 = vadd.f32 %v653, %v659
        %v662 = vadd.f32 %v654, %v659
        %v663 = vadd.f32 %v661, %v381
        %v664 = vadd.f32 %v662, %v395
        %v667 = vcombine.low %v663, %v664
        %669 = vst [vmem:[%s364] sm:$0xff] %v667
        %s670 = sand.u32 %s220, 1
        %s671 = scalar_lea.sflag [#allocation4], %s670
        %s672 = sand.u32 %s220, 1
        %s673 = smul.addr %s672, 8
        %s674 = scalar_lea.vmem [#allocation5], %s673
        // Predicated region
        $region53: #{tpu_custom_call.1} parent=47 // pred_check
          %p675 = pneg %p230
        $region54: #{tpu_custom_call.1} parent=47 // pred_check_branch
          %677 = sbr.rel (%p675) target = $region56
        $region55: #{tpu_custom_call.1} parent=47 // pred_region
          %s679 = ssub.s32 128, 128
          %680 = vsyncadd %s671, %s679
          %s681 = smul.addr %s29, 2
          %s682 = smul.addr %s28, 2
          %s683 = sadd.s32 %s681, %s682
          %s684 = smul.addr %s683, 64
          %s685 = scalar_lea.hbm %s7, %s684
          %s687 = sshll.u32 %s674, 4
          %s688 = int_to_ptr.vmem [resolvable:$true] %s687
          %690 = dma.vmem_to_hbm [thread:$0]  %s688, 128, %s685, %s671
        $region56: #{tpu_custom_call.1} parent=47 // pred_fallthru
          _
      $region48: #{tpu_custom_call.1} parent=5 // pred_fallthru
        _
      %p691 = scmp.le.s32.totalorder 2, %s19
      // Predicated region
      $region57: #{tpu_custom_call.1} parent=5 // pred_check
        %p692 = pneg %p691
      $region58: #{tpu_custom_call.1} parent=5 // pred_check_branch
        %694 = sbr.rel (%p692) target = $region60
      $region59: #{tpu_custom_call.1} parent=5 // pred_region
        %s695 = ssub.s32 %s19, 2
        // Predicated region
        $region61: #{tpu_custom_call.1} parent=59 // pred_check
          %p696 = pneg %p236
        $region62: #{tpu_custom_call.1} parent=59 // pred_check_branch
          %698 = sbr.rel (%p696) target = $region64
        $region63: #{tpu_custom_call.1} parent=59 // pred_region
          %s699 = sand.u32 %s221, 1
          %s700 = scalar_lea.sflag [#allocation4], %s699
          %s701 = sand.u32 %s221, 1
          %s702 = smul.addr %s701, 8
          %s703 = scalar_lea.vmem [#allocation5], %s702
          %704 = dma.done %s700, 128
        $region64: #{tpu_custom_call.1} parent=59 // pred_fallthru
          _
      $region60: #{tpu_custom_call.1} parent=5 // pred_fallthru
        _
    $region6: #{tpu_custom_call.1} parent=1 // loop_footer
      %s23 = sadd.s32 1, %s19
    $region7: #{tpu_custom_call.1} parent=1 // loop_footer_branch
      %18 = sbr.rel target = $region3
    $region8: #{tpu_custom_call.1} parent=1 // loop_exit
      _
    %705 = vsyncpa [#allocation3], 1
    %s706 = scalar_lea.sflag [#allocation3], 1
    %707 = vsyncpa %s706, 1
    %708 = vsyncpa [#allocation4], 1
    %s709 = scalar_lea.sflag [#allocation4], 1
    %710 = vsyncpa %s709, 1

</llo_original>
